<compile_context>
chip_gen: v6e
topology: v6e:2x2x1
jax: 0.10.0
libtpu: 0.0.40
codegen_flags: <defaults>
</compile_context>

<pallas_src>
import jax
import jax.numpy as jnp
from jax import lax
from jax.experimental import pallas as pl
from jax.experimental.pallas import tpu as pltpu


def birnn_linear_kernel(x_ref, wih_ref, b_ref, whh_ref, wlin_ref, blin_ref,
                        out_ref):
    """Full bidirectional tanh-RNN recurrence + final linear, in one kernel.

    x_ref    : (B, T, D)    batch-first input (as in the PyTorch module)
    wih_ref  : (D, 2H)      [W_ih_fwd | W_ih_bwd], pre-transposed
    b_ref    : (1, 2H)      [b_ih_f + b_hh_f | b_ih_b + b_hh_b]
    whh_ref  : (2H, 2H)     block-diag([W_hh_fwd, W_hh_bwd]), pre-transposed
    wlin_ref : (2H, C)      linear weight, pre-transposed
    blin_ref : (1, C)       linear bias
    out_ref  : (B, C)
    """
    B, T, D = x_ref.shape
    H2 = whh_ref.shape[0]
    H = H2 // 2

    # Hoisted loads (reused across the unrolled recurrence).
    wih = wih_ref[...]
    bias = b_ref[...]
    whh = whh_ref[...]

    # --- hoisted input projection: ONE MXU matmul for both directions -------
    x_flat = x_ref[...].reshape(B * T, D)
    proj = (jnp.dot(x_flat, wih, preferred_element_type=jnp.float32)
            + bias).reshape(B, T, H2)

    def step_proj(t):
        # forward direction reads time t, backward direction reads T-1-t;
        # indices are static (loop unrolled) and the split/concat sits exactly
        # on the 128-lane boundary (H = 128), so it is vreg placement only.
        return jnp.concatenate([proj[:, t, :H], proj[:, T - 1 - t, H:]],
                               axis=1)                       # (B, 2H)

    # --- serial recurrence, fully unrolled (T is small and static) ----------
    # h0 = 0, so the first step is just tanh of the projection.
    h = jnp.tanh(step_proj(0))                               # (B, 2H)
    for t in range(1, T):
        h = jnp.tanh(
            jnp.dot(h, whh, preferred_element_type=jnp.float32)
            + step_proj(t))

    # --- classifier head: h already equals cat(hidden[0], hidden[1], dim=1) -
    out_ref[...] = (jnp.dot(h, wlin_ref[...],
                            preferred_element_type=jnp.float32)
                    + blin_ref[...]).astype(out_ref.dtype)


def bi_rnn_model_forward(x, params):
    """x: (B, T, D) float32, batch_first like the PyTorch module."""
    (w_ih_f, w_hh_f, b_f, w_ih_b, w_hh_b, b_b, w_lin, b_lin) = params
    B, T, D = x.shape
    H = w_hh_f.shape[0]
    C = w_lin.shape[1]

    # One-time fusion of the parameters into MXU-friendly operands.
    w_ih_cat = jnp.concatenate([w_ih_f, w_ih_b], axis=1)          # (D, 2H)
    b_cat = jnp.concatenate([b_f, b_b], axis=1)                   # (1, 2H)
    w_hh_blk = jnp.zeros((2 * H, 2 * H), jnp.float32)
    w_hh_blk = w_hh_blk.at[:H, :H].set(w_hh_f)
    w_hh_blk = w_hh_blk.at[H:, H:].set(w_hh_b)                    # block-diag

    vmem = pl.BlockSpec(memory_space=pltpu.MemorySpace.VMEM)
    out = pl.pallas_call(
        birnn_linear_kernel,
        out_shape=jax.ShapeDtypeStruct((B, C), jnp.float32),
        in_specs=[vmem] * 6,
        out_specs=vmem,
    )(x, w_ih_cat, b_cat, w_hh_blk, w_lin, b_lin)
    return out


def init_params(key, n_input, n_hidden, n_class):
    """Deterministic init matching the PyTorch parameter shapes.
    Weights are stored already transposed for `x @ W` in the kernel."""
    k = jax.random.split(key, 10)
    s_rnn = 1.0 / jnp.sqrt(n_hidden)
    s_lin = 1.0 / jnp.sqrt(2 * n_hidden)

    def u(kk, shape, s):
        return jax.random.uniform(kk, shape, jnp.float32, -s, s)

    # forward direction
    w_ih_f = u(k[0], (n_input, n_hidden), s_rnn)     # (D, H)
    w_hh_f = u(k[1], (n_hidden, n_hidden), s_rnn)    # (H, H)
    b_f = (u(k[2], (1, n_hidden), s_rnn)
           + u(k[3], (1, n_hidden), s_rnn))          # b_ih + b_hh
    # backward direction
    w_ih_b = u(k[4], (n_input, n_hidden), s_rnn)
    w_hh_b = u(k[5], (n_hidden, n_hidden), s_rnn)
    b_b = (u(k[6], (1, n_hidden), s_rnn)
           + u(k[7], (1, n_hidden), s_rnn))
    # linear head
    w_lin = u(k[8], (2 * n_hidden, n_class), s_lin)  # (2H, C)
    b_lin = u(k[9], (1, n_class), s_lin)
    return (w_ih_f, w_hh_f, b_f, w_ih_b, w_hh_b, b_b, w_lin, b_lin)


def reference_forward(x, params):
    """Pure-JAX reference reproducing torch nn.RNN(bidirectional) + Linear."""
    (w_ih_f, w_hh_f, b_f, w_ih_b, w_hh_b, b_b, w_lin, b_lin) = params
    B, T, D = x.shape
    H = w_hh_f.shape[0]

    def run(dir_x, w_ih, w_hh, b):
        def step(h, x_t):
            h = jnp.tanh(x_t @ w_ih + h @ w_hh + b)
            return h, None
        h_final, _ = lax.scan(step, jnp.zeros((B, H), jnp.float32),
                              jnp.transpose(dir_x, (1, 0, 2)))
        return h_final

    h_f = run(x, w_ih_f, w_hh_f, b_f)                 # hidden[0]
    h_b = run(x[:, ::-1, :], w_ih_b, w_hh_b, b_b)     # hidden[1]
    return jnp.concatenate([h_f, h_b], axis=1) @ w_lin + b_lin


if __name__ == "__main__":
    # Small shapes consistent with the module: x is (batch, seq_len, n_input),
    # n_hidden = 128 (as in the spec), n_class = 5 newsgroup categories.
    B, T, D = 4, 8, 16
    H, C = 128, 5

    key = jax.random.PRNGKey(0)
    kx, kp = jax.random.split(key)
    x = jax.random.normal(kx, (B, T, D), jnp.float32)
    params = init_params(kp, D, H, C)

    forward = jax.jit(bi_rnn_model_forward)
    out = jax.block_until_ready(forward(x, params))

    ref = reference_forward(x, params)
    assert out.shape == (B, C)
    assert jnp.allclose(out, ref, atol=1e-4, rtol=1e-4), "mismatch vs reference"

    print("KERNEL_OK")
</pallas_src>

<mosaic_0001>
module attributes {stable_mosaic.version = 11 : i64} {
  func.func @birnn_linear_kernel(%arg0: memref<4x8x16xf32, #tpu.memory_space<vmem>>, %arg1: memref<16x256xf32, #tpu.memory_space<vmem>>, %arg2: memref<1x256xf32, #tpu.memory_space<vmem>>, %arg3: memref<256x256xf32, #tpu.memory_space<vmem>>, %arg4: memref<256x5xf32, #tpu.memory_space<vmem>>, %arg5: memref<1x5xf32, #tpu.memory_space<vmem>>, %arg6: memref<4x5xf32, #tpu.memory_space<vmem>>) attributes {dimension_semantics = [], scalar_prefetch = 0 : i64, scratch_operands = 0 : i64, tpu.core_type = #tpu.core_type<tc>} {
    %c0 = arith.constant 0 : index
    %c0_0 = arith.constant 0 : index
    %0 = vector.load %arg1[%c0, %c0_0] : memref<16x256xf32, #tpu.memory_space<vmem>>, vector<16x256xf32>
    %c0_1 = arith.constant 0 : index
    %c0_2 = arith.constant 0 : index
    %1 = vector.load %arg2[%c0_1, %c0_2] : memref<1x256xf32, #tpu.memory_space<vmem>>, vector<1x256xf32>
    %c0_3 = arith.constant 0 : index
    %c0_4 = arith.constant 0 : index
    %2 = vector.load %arg3[%c0_3, %c0_4] : memref<256x256xf32, #tpu.memory_space<vmem>>, vector<256x256xf32>
    %c0_5 = arith.constant 0 : index
    %c0_6 = arith.constant 0 : index
    %c0_7 = arith.constant 0 : index
    %3 = vector.load %arg0[%c0_5, %c0_6, %c0_7] : memref<4x8x16xf32, #tpu.memory_space<vmem>>, vector<4x8x16xf32>
    %4 = vector.shape_cast %3 : vector<4x8x16xf32> to vector<32x16xf32>
    %cst = arith.constant dense<0.000000e+00> : vector<32x256xf32>
    %5 = tpu.matmul %4, %0, %cst {dimension_numbers = #tpu.dot_dimension_numbers<[1], [0], [0], [1], [0, 0, 1, 1], [], []>} : vector<32x16xf32>, vector<16x256xf32>, vector<32x256xf32> -> vector<32x256xf32>
    %6 = vector.broadcast %1 : vector<1x256xf32> to vector<32x256xf32>
    %7 = arith.addf %5, %6 : vector<32x256xf32>
    %8 = vector.shape_cast %7 : vector<32x256xf32> to vector<4x8x256xf32>
    %9 = vector.extract_strided_slice %8 {offsets = [0, 0, 0], sizes = [4, 1, 128], strides = [1, 1, 1]} : vector<4x8x256xf32> to vector<4x1x128xf32>
    %10 = vector.shape_cast %9 : vector<4x1x128xf32> to vector<4x128xf32>
    %11 = vector.extract_strided_slice %8 {offsets = [0, 7, 128], sizes = [4, 1, 128], strides = [1, 1, 1]} : vector<4x8x256xf32> to vector<4x1x128xf32>
    %12 = vector.shape_cast %11 : vector<4x1x128xf32> to vector<4x128xf32>
    %13 = tpu.concatenate %10, %12 in 1 : vector<4x128xf32>, vector<4x128xf32> -> vector<4x256xf32>
    %14 = math.tanh %13 : vector<4x256xf32>
    %cst_8 = arith.constant dense<0.000000e+00> : vector<4x256xf32>
    %15 = tpu.matmul %14, %2, %cst_8 {dimension_numbers = #tpu.dot_dimension_numbers<[1], [0], [0], [1], [0, 0, 1, 1], [], []>} : vector<4x256xf32>, vector<256x256xf32>, vector<4x256xf32> -> vector<4x256xf32>
    %16 = vector.extract_strided_slice %8 {offsets = [0, 1, 0], sizes = [4, 1, 128], strides = [1, 1, 1]} : vector<4x8x256xf32> to vector<4x1x128xf32>
    %17 = vector.shape_cast %16 : vector<4x1x128xf32> to vector<4x128xf32>
    %18 = vector.extract_strided_slice %8 {offsets = [0, 6, 128], sizes = [4, 1, 128], strides = [1, 1, 1]} : vector<4x8x256xf32> to vector<4x1x128xf32>
    %19 = vector.shape_cast %18 : vector<4x1x128xf32> to vector<4x128xf32>
    %20 = tpu.concatenate %17, %19 in 1 : vector<4x128xf32>, vector<4x128xf32> -> vector<4x256xf32>
    %21 = arith.addf %15, %20 : vector<4x256xf32>
    %22 = math.tanh %21 : vector<4x256xf32>
    %cst_9 = arith.constant dense<0.000000e+00> : vector<4x256xf32>
    %23 = tpu.matmul %22, %2, %cst_9 {dimension_numbers = #tpu.dot_dimension_numbers<[1], [0], [0], [1], [0, 0, 1, 1], [], []>} : vector<4x256xf32>, vector<256x256xf32>, vector<4x256xf32> -> vector<4x256xf32>
    %24 = vector.extract_strided_slice %8 {offsets = [0, 2, 0], sizes = [4, 1, 128], strides = [1, 1, 1]} : vector<4x8x256xf32> to vector<4x1x128xf32>
    %25 = vector.shape_cast %24 : vector<4x1x128xf32> to vector<4x128xf32>
    %26 = vector.extract_strided_slice %8 {offsets = [0, 5, 128], sizes = [4, 1, 128], strides = [1, 1, 1]} : vector<4x8x256xf32> to vector<4x1x128xf32>
    %27 = vector.shape_cast %26 : vector<4x1x128xf32> to vector<4x128xf32>
    %28 = tpu.concatenate %25, %27 in 1 : vector<4x128xf32>, vector<4x128xf32> -> vector<4x256xf32>
    %29 = arith.addf %23, %28 : vector<4x256xf32>
    %30 = math.tanh %29 : vector<4x256xf32>
    %cst_10 = arith.constant dense<0.000000e+00> : vector<4x256xf32>
    %31 = tpu.matmul %30, %2, %cst_10 {dimension_numbers = #tpu.dot_dimension_numbers<[1], [0], [0], [1], [0, 0, 1, 1], [], []>} : vector<4x256xf32>, vector<256x256xf32>, vector<4x256xf32> -> vector<4x256xf32>
    %32 = vector.extract_strided_slice %8 {offsets = [0, 3, 0], sizes = [4, 1, 128], strides = [1, 1, 1]} : vector<4x8x256xf32> to vector<4x1x128xf32>
    %33 = vector.shape_cast %32 : vector<4x1x128xf32> to vector<4x128xf32>
    %34 = vector.extract_strided_slice %8 {offsets = [0, 4, 128], sizes = [4, 1, 128], strides = [1, 1, 1]} : vector<4x8x256xf32> to vector<4x1x128xf32>
    %35 = vector.shape_cast %34 : vector<4x1x128xf32> to vector<4x128xf32>
    %36 = tpu.concatenate %33, %35 in 1 : vector<4x128xf32>, vector<4x128xf32> -> vector<4x256xf32>
    %37 = arith.addf %31, %36 : vector<4x256xf32>
    %38 = math.tanh %37 : vector<4x256xf32>
    %cst_11 = arith.constant dense<0.000000e+00> : vector<4x256xf32>
    %39 = tpu.matmul %38, %2, %cst_11 {dimension_numbers = #tpu.dot_dimension_numbers<[1], [0], [0], [1], [0, 0, 1, 1], [], []>} : vector<4x256xf32>, vector<256x256xf32>, vector<4x256xf32> -> vector<4x256xf32>
    %40 = vector.extract_strided_slice %8 {offsets = [0, 4, 0], sizes = [4, 1, 128], strides = [1, 1, 1]} : vector<4x8x256xf32> to vector<4x1x128xf32>
    %41 = vector.shape_cast %40 : vector<4x1x128xf32> to vector<4x128xf32>
    %42 = vector.extract_strided_slice %8 {offsets = [0, 3, 128], sizes = [4, 1, 128], strides = [1, 1, 1]} : vector<4x8x256xf32> to vector<4x1x128xf32>
    %43 = vector.shape_cast %42 : vector<4x1x128xf32> to vector<4x128xf32>
    %44 = tpu.concatenate %41, %43 in 1 : vector<4x128xf32>, vector<4x128xf32> -> vector<4x256xf32>
    %45 = arith.addf %39, %44 : vector<4x256xf32>
    %46 = math.tanh %45 : vector<4x256xf32>
    %cst_12 = arith.constant dense<0.000000e+00> : vector<4x256xf32>
    %47 = tpu.matmul %46, %2, %cst_12 {dimension_numbers = #tpu.dot_dimension_numbers<[1], [0], [0], [1], [0, 0, 1, 1], [], []>} : vector<4x256xf32>, vector<256x256xf32>, vector<4x256xf32> -> vector<4x256xf32>
    %48 = vector.extract_strided_slice %8 {offsets = [0, 5, 0], sizes = [4, 1, 128], strides = [1, 1, 1]} : vector<4x8x256xf32> to vector<4x1x128xf32>
    %49 = vector.shape_cast %48 : vector<4x1x128xf32> to vector<4x128xf32>
    %50 = vector.extract_strided_slice %8 {offsets = [0, 2, 128], sizes = [4, 1, 128], strides = [1, 1, 1]} : vector<4x8x256xf32> to vector<4x1x128xf32>
    %51 = vector.shape_cast %50 : vector<4x1x128xf32> to vector<4x128xf32>
    %52 = tpu.concatenate %49, %51 in 1 : vector<4x128xf32>, vector<4x128xf32> -> vector<4x256xf32>
    %53 = arith.addf %47, %52 : vector<4x256xf32>
    %54 = math.tanh %53 : vector<4x256xf32>
    %cst_13 = arith.constant dense<0.000000e+00> : vector<4x256xf32>
    %55 = tpu.matmul %54, %2, %cst_13 {dimension_numbers = #tpu.dot_dimension_numbers<[1], [0], [0], [1], [0, 0, 1, 1], [], []>} : vector<4x256xf32>, vector<256x256xf32>, vector<4x256xf32> -> vector<4x256xf32>
    %56 = vector.extract_strided_slice %8 {offsets = [0, 6, 0], sizes = [4, 1, 128], strides = [1, 1, 1]} : vector<4x8x256xf32> to vector<4x1x128xf32>
    %57 = vector.shape_cast %56 : vector<4x1x128xf32> to vector<4x128xf32>
    %58 = vector.extract_strided_slice %8 {offsets = [0, 1, 128], sizes = [4, 1, 128], strides = [1, 1, 1]} : vector<4x8x256xf32> to vector<4x1x128xf32>
    %59 = vector.shape_cast %58 : vector<4x1x128xf32> to vector<4x128xf32>
    %60 = tpu.concatenate %57, %59 in 1 : vector<4x128xf32>, vector<4x128xf32> -> vector<4x256xf32>
    %61 = arith.addf %55, %60 : vector<4x256xf32>
    %62 = math.tanh %61 : vector<4x256xf32>
    %cst_14 = arith.constant dense<0.000000e+00> : vector<4x256xf32>
    %63 = tpu.matmul %62, %2, %cst_14 {dimension_numbers = #tpu.dot_dimension_numbers<[1], [0], [0], [1], [0, 0, 1, 1], [], []>} : vector<4x256xf32>, vector<256x256xf32>, vector<4x256xf32> -> vector<4x256xf32>
    %64 = vector.extract_strided_slice %8 {offsets = [0, 7, 0], sizes = [4, 1, 128], strides = [1, 1, 1]} : vector<4x8x256xf32> to vector<4x1x128xf32>
    %65 = vector.shape_cast %64 : vector<4x1x128xf32> to vector<4x128xf32>
    %66 = vector.extract_strided_slice %8 {offsets = [0, 0, 128], sizes = [4, 1, 128], strides = [1, 1, 1]} : vector<4x8x256xf32> to vector<4x1x128xf32>
    %67 = vector.shape_cast %66 : vector<4x1x128xf32> to vector<4x128xf32>
    %68 = tpu.concatenate %65, %67 in 1 : vector<4x128xf32>, vector<4x128xf32> -> vector<4x256xf32>
    %69 = arith.addf %63, %68 : vector<4x256xf32>
    %70 = math.tanh %69 : vector<4x256xf32>
    %c0_15 = arith.constant 0 : index
    %c0_16 = arith.constant 0 : index
    %71 = vector.load %arg4[%c0_15, %c0_16] : memref<256x5xf32, #tpu.memory_space<vmem>>, vector<256x5xf32>
    %cst_17 = arith.constant dense<0.000000e+00> : vector<4x5xf32>
    %72 = tpu.matmul %70, %71, %cst_17 {dimension_numbers = #tpu.dot_dimension_numbers<[1], [0], [0], [1], [0, 0, 1, 1], [], []>} : vector<4x256xf32>, vector<256x5xf32>, vector<4x5xf32> -> vector<4x5xf32>
    %c0_18 = arith.constant 0 : index
    %c0_19 = arith.constant 0 : index
    %73 = vector.load %arg5[%c0_18, %c0_19] : memref<1x5xf32, #tpu.memory_space<vmem>>, vector<1x5xf32>
    %74 = vector.broadcast %73 : vector<1x5xf32> to vector<4x5xf32>
    %75 = arith.addf %72, %74 : vector<4x5xf32>
    %c0_20 = arith.constant 0 : index
    %c0_21 = arith.constant 0 : index
    %76 = vector.load %arg6[%c0_20, %c0_21] : memref<4x5xf32, #tpu.memory_space<vmem>>, vector<4x5xf32>
    tpu.vector_store %arg6[%c0_20, %c0_21], %75 {strides = array<i32>} : memref<4x5xf32, #tpu.memory_space<vmem>>, vector<4x5xf32>,
    return
  }
}

</mosaic_0001>

<llo_original>
// kernel: bi_rnn_model_forward.1
$region0: #{bi_rnn_model_forward.1}
  #allocation0 [shape = 'u32[]', space=smem, size = 0x4, offset = 0x4, fixed_abs, tag = 'smem constant byte address 0x4 - core index']
  #allocation1 [shape = 'u32[144,128]{1,0:T(1,128)}', space=vmem, size = 0x12000, scoped, tag = 'internal scratch']
  %s0 = inlined_call_operand.vmem [shape: f32[4,8,16], index: 0, kind: input, shape index: {}]
  %s1 = inlined_call_operand.vmem [shape: f32[16,256], index: 1, kind: input, shape index: {}]
  %s2 = inlined_call_operand.vmem [shape: f32[1,256], index: 2, kind: input, shape index: {}]
  %s3 = inlined_call_operand.vmem [shape: f32[256,256], index: 3, kind: input, shape index: {}]
  %s4 = inlined_call_operand.vmem [shape: f32[256,5], index: 4, kind: input, shape index: {}]
  %s5 = inlined_call_operand.vmem [shape: f32[1,5], index: 5, kind: input, shape index: {}]
  %s6 = inlined_call_operand.hbm [shape: f32[4,5], index: 6, kind: output, shape index: {}]
  %s7 = sld [smem:[#allocation0]]
  $region34: #{bi_rnn_model_forward.1} parent=0
    _
  %s9 = ssub.s32 1, %s7
  %s10 = scalar_select 0, %s9, %s7
  $region1: #{bi_rnn_model_forward.1} parent=0
    #allocation2 [shape = 'u8[2048]{0}', space=vmem, size = 0x800, scoped, tag = 'output window, operand 0, single buffered']
    #allocation3 [shape = 's32[1]{0}', space=sflag, size = 0x4, scoped, tag = 'scoped memory for bi_rnn_model_forward.1']
    %11 = vsyncpa [#allocation3], 0
    // Predicated region
    $region2: #{bi_rnn_model_forward.1} parent=1 // pred_check
      _
    $region3: #{bi_rnn_model_forward.1} parent=1 // pred_check_branch
      %13 = sbr.rel (0) target = $region5
    $region4: #{bi_rnn_model_forward.1} parent=1 // pred_region
      _
    $region5: #{bi_rnn_model_forward.1} parent=1 // pred_fallthru
      _
    // Predicated region
    $region6: #{bi_rnn_model_forward.1} parent=1 // pred_check
      _
    $region7: #{bi_rnn_model_forward.1} parent=1 // pred_check_branch
      %15 = sbr.rel (0) target = $region9
    $region8: #{bi_rnn_model_forward.1} parent=1 // pred_region
      _
    $region9: #{bi_rnn_model_forward.1} parent=1 // pred_fallthru
      _
    // Predicated region
    $region10: #{bi_rnn_model_forward.1} parent=1 // pred_check
      _
    $region11: #{bi_rnn_model_forward.1} parent=1 // pred_check_branch
      %17 = sbr.rel (0) target = $region13
    $region12: #{bi_rnn_model_forward.1} parent=1 // pred_region
      _
    $region13: #{bi_rnn_model_forward.1} parent=1 // pred_fallthru
      _
    // Predicated region
    $region14: #{bi_rnn_model_forward.1} parent=1 // pred_check
      _
    $region15: #{bi_rnn_model_forward.1} parent=1 // pred_check_branch
      %19 = sbr.rel (0) target = $region17
    $region16: #{bi_rnn_model_forward.1} parent=1 // pred_region
      _
    $region17: #{bi_rnn_model_forward.1} parent=1 // pred_fallthru
      _
    // Predicated region
    $region18: #{bi_rnn_model_forward.1} parent=1 // pred_check
      _
    $region19: #{bi_rnn_model_forward.1} parent=1 // pred_check_branch
      %21 = sbr.rel (0) target = $region21
    $region20: #{bi_rnn_model_forward.1} parent=1 // pred_region
      _
    $region21: #{bi_rnn_model_forward.1} parent=1 // pred_fallthru
      _
    // Predicated region
    $region22: #{bi_rnn_model_forward.1} parent=1 // pred_check
      _
    $region23: #{bi_rnn_model_forward.1} parent=1 // pred_check_branch
      %23 = sbr.rel (0) target = $region25
    $region24: #{bi_rnn_model_forward.1} parent=1 // pred_region
      _
    $region25: #{bi_rnn_model_forward.1} parent=1 // pred_fallthru
      _
    %v24 = vld [vmem:[%s1] sm:$0xff]
    %v25 = vld [vmem:[%s1 + $0x8] sm:$0xff]
    %v26 = vld [vmem:[%s1 + $0x10] sm:$0xff]
    %v27 = vld [vmem:[%s1 + $0x18] sm:$0xff]
    %v28 = vld [vmem:[%s2] sm:$0x3]
    %v29 = vld [vmem:[%s3] sm:$0xff]
    %v30 = vld [vmem:[%s3 + $0x8] sm:$0xff]
    %v31 = vld [vmem:[%s3 + $0x10] sm:$0xff]
    %v32 = vld [vmem:[%s3 + $0x18] sm:$0xff]
    %v33 = vld [vmem:[%s3 + $0x20] sm:$0xff]
    %v34 = vld [vmem:[%s3 + $0x28] sm:$0xff]
    %v35 = vld [vmem:[%s3 + $0x30] sm:$0xff]
    %v36 = vld [vmem:[%s3 + $0x38] sm:$0xff]
    %v37 = vld [vmem:[%s3 + $0x40] sm:$0xff]
    %v38 = vld [vmem:[%s3 + $0x48] sm:$0xff]
    %v39 = vld [vmem:[%s3 + $0x50] sm:$0xff]
    %v40 = vld [vmem:[%s3 + $0x58] sm:$0xff]
    %v41 = vld [vmem:[%s3 + $0x60] sm:$0xff]
    %v42 = vld [vmem:[%s3 + $0x68] sm:$0xff]
    %v43 = vld [vmem:[%s3 + $0x70] sm:$0xff]
    %v44 = vld [vmem:[%s3 + $0x78] sm:$0xff]
    %v45 = vld [vmem:[%s3 + $0x80] sm:$0xff]
    %v46 = vld [vmem:[%s3 + $0x88] sm:$0xff]
    %v47 = vld [vmem:[%s3 + $0x90] sm:$0xff]
    %v48 = vld [vmem:[%s3 + $0x98] sm:$0xff]
    %v49 = vld [vmem:[%s3 + $0xa0] sm:$0xff]
    %v50 = vld [vmem:[%s3 + $0xa8] sm:$0xff]
    %v51 = vld [vmem:[%s3 + $0xb0] sm:$0xff]
    %v52 = vld [vmem:[%s3 + $0xb8] sm:$0xff]
    %v53 = vld [vmem:[%s3 + $0xc0] sm:$0xff]
    %v54 = vld [vmem:[%s3 + $0xc8] sm:$0xff]
    %v55 = vld [vmem:[%s3 + $0xd0] sm:$0xff]
    %v56 = vld [vmem:[%s3 + $0xd8] sm:$0xff]
    %v57 = vld [vmem:[%s3 + $0xe0] sm:$0xff]
    %v58 = vld [vmem:[%s3 + $0xe8] sm:$0xff]
    %v59 = vld [vmem:[%s3 + $0xf0] sm:$0xff]
    %v60 = vld [vmem:[%s3 + $0xf8] sm:$0xff]
    %v61 = vld [vmem:[%s3 + $0x100] sm:$0xff]
    %v62 = vld [vmem:[%s3 + $0x108] sm:$0xff]
    %v63 = vld [vmem:[%s3 + $0x110] sm:$0xff]
    %v64 = vld [vmem:[%s3 + $0x118] sm:$0xff]
    %v65 = vld [vmem:[%s3 + $0x120] sm:$0xff]
    %v66 = vld [vmem:[%s3 + $0x128] sm:$0xff]
    %v67 = vld [vmem:[%s3 + $0x130] sm:$0xff]
    %v68 = vld [vmem:[%s3 + $0x138] sm:$0xff]
    %v69 = vld [vmem:[%s3 + $0x140] sm:$0xff]
    %v70 = vld [vmem:[%s3 + $0x148] sm:$0xff]
    %v71 = vld [vmem:[%s3 + $0x150] sm:$0xff]
    %v72 = vld [vmem:[%s3 + $0x158] sm:$0xff]
    %v73 = vld [vmem:[%s3 + $0x160] sm:$0xff]
    %v74 = vld [vmem:[%s3 + $0x168] sm:$0xff]
    %v75 = vld [vmem:[%s3 + $0x170] sm:$0xff]
    %v76 = vld [vmem:[%s3 + $0x178] sm:$0xff]
    %v77 = vld [vmem:[%s3 + $0x180] sm:$0xff]
    %v78 = vld [vmem:[%s3 + $0x188] sm:$0xff]
    %v79 = vld [vmem:[%s3 + $0x190] sm:$0xff]
    %v80 = vld [vmem:[%s3 + $0x198] sm:$0xff]
    %v81 = vld [vmem:[%s3 + $0x1a0] sm:$0xff]
    %v82 = vld [vmem:[%s3 + $0x1a8] sm:$0xff]
    %v83 = vld [vmem:[%s3 + $0x1b0] sm:$0xff]
    %v84 = vld [vmem:[%s3 + $0x1b8] sm:$0xff]
    %v85 = vld [vmem:[%s3 + $0x1c0] sm:$0xff]
    %v86 = vld [vmem:[%s3 + $0x1c8] sm:$0xff]
    %v87 = vld [vmem:[%s3 + $0x1d0] sm:$0xff]
    %v88 = vld [vmem:[%s3 + $0x1d8] sm:$0xff]
    %v89 = vld [vmem:[%s3 + $0x1e0] sm:$0xff]
    %v90 = vld [vmem:[%s3 + $0x1e8] sm:$0xff]
    %v91 = vld [vmem:[%s3 + $0x1f0] sm:$0xff]
    %v92 = vld [vmem:[%s3 + $0x1f8] sm:$0xff]
    %v93 = vld [vmem:[%s0] sm:$0xff]
    %v94 = vld [vmem:[%s0 + $0x8] sm:$0xff]
    %v95 = vld [vmem:[%s0 + $0x10] sm:$0xff]
    %v96 = vld [vmem:[%s0 + $0x18] sm:$0xff]
    %v98 = vlaneseq
    %v99 = vshrl.u32 %v98, 7
    %v100 = vsub.s32 0, %v99
    %v101 = vrot.slane %v28, %v100
    %v102 = vlaneseq
    %v103 = vshrl.u32 %v102, 7
    %v104 = vsub.s32 1, %v103
    %v105 = vrot.slane %v28, %v104
    %vm108 = vcmask 130048
    %v110 = vsel %vm108, %v93, 0
    %v113 = vsel %vm108, %v94, 0
    %v116 = vsel %vm108, %v95, 0
    %v119 = vsel %vm108, %v96, 0
    %121 = vmatprep.subr.mxu0 0.0
    %122 = vmatpush1.msra.mxu0 0.0
    %123 = vmatprep.subr.mxu0 0.0
    %124 = vmatpush1.msra.mxu0 0.0
    %125 = vmatprep.subr.mxu0 0.0
    %126 = vmatpush1.msra.mxu0 0.0
    %127 = vmatprep.subr.mxu0 0.0
    %128 = vmatpush1.msra.mxu0 0.0
    %129 = vmatprep.subr.mxu0 0.0
    %130 = vmatpush1.msra.mxu0 0.0
    %131 = vmatprep.subr.mxu0 0.0
    %132 = vmatpush1.msra.mxu0 0.0
    %133 = vmatprep.subr.mxu0 0.0
    %134 = vmatpush1.msra.mxu0 0.0
    %135 = vmatprep.subr.mxu0 0.0
    %136 = vmatpush1.msra.mxu0 0.0
    %137 = vmatprep.subr.mxu0 0.0
    %138 = vmatpush1.msra.mxu0 0.0
    %139 = vmatprep.subr.mxu0 0.0
    %140 = vmatpush1.msra.mxu0 0.0
    %141 = vmatprep.subr.mxu0 0.0
    %142 = vmatpush1.msra.mxu0 0.0
    %143 = vmatprep.subr.mxu0 0.0
    %144 = vmatpush1.msra.mxu0 0.0
    %145 = vmatprep.subr.mxu0 0.0
    %146 = vmatpush1.msra.mxu0 0.0
    %147 = vmatprep.subr.mxu0 0.0
    %148 = vmatpush1.msra.mxu0 0.0
    %149 = vmatprep.subr.mxu0 %v27
    %150 = vmatpush1.msra.mxu0 %v26
    %151 = vmatprep.subr.mxu0 %v25
    %152 = vmatpush1.msra.mxu0 %v24
    %153 = vmatprep.subr.mxu0 0.0
    %154 = vmatpush2.msra.mxu0 0.0
    %155 = vmatprep.subr.mxu0 0.0
    %156 = vmatpush2.msra.mxu0 0.0
    %157 = vmatprep.subr.mxu0 0.0
    %158 = vmatpush2.msra.mxu0 0.0
    %159 = vmatprep.subr.mxu0 0.0
    %160 = vmatpush2.msra.mxu0 0.0
    %161 = vmatprep.subr.mxu0 0.0
    %162 = vmatpush2.msra.mxu0 0.0
    %163 = vmatprep.subr.mxu0 0.0
    %164 = vmatpush2.msra.mxu0 0.0
    %165 = vmatprep.subr.mxu0 0.0
    %166 = vmatpush2.msra.mxu0 0.0
    %167 = vmatprep.subr.mxu0 0.0
    %168 = vmatpush2.msra.mxu0 0.0
    %169 = vmatprep.subr.mxu0 0.0
    %170 = vmatpush2.msra.mxu0 0.0
    %171 = vmatprep.subr.mxu0 0.0
    %172 = vmatpush2.msra.mxu0 0.0
    %173 = vmatprep.subr.mxu0 0.0
    %174 = vmatpush2.msra.mxu0 0.0
    %175 = vmatprep.subr.mxu0 0.0
    %176 = vmatpush2.msra.mxu0 0.0
    %177 = vmatprep.subr.mxu0 0.0
    %178 = vmatpush2.msra.mxu0 0.0
    %179 = vmatprep.subr.mxu0 0.0
    %180 = vmatpush2.msra.mxu0 0.0
    %181 = vmatprep.subr.mxu0 0.0
    %182 = vmatpush2.msra.mxu0 0.0
    %183 = vmatprep.subr.mxu0 0.0
    %184 = vmatpush2.msra.mxu0 0.0
    %185 = vmatprep.mubr.f32.mxu0 0.0
    %186 = vmatmul.mubr.f32.gmra.mxu0 %v110
    %v187 = vpop.f32.mrf.mxu0
    %v188 = vadd.f32 %v101, %v187
    %v189 = vpop.f32.mrf.mxu0
    %v190 = vadd.f32 %v105, %v189
    %191 = vmatprep.mubr.f32.mxu0 0.0
    %192 = vmatmul.mubr.f32.gmra.mxu0 %v113
    %v193 = vpop.f32.mrf.mxu0
    %v194 = vadd.f32 %v101, %v193
    %v195 = vpop.f32.mrf.mxu0
    %v196 = vadd.f32 %v105, %v195
    %197 = vmatprep.mubr.f32.mxu0 0.0
    %198 = vmatmul.mubr.f32.gmra.mxu0 %v116
    %v199 = vpop.f32.mrf.mxu0
    %v200 = vadd.f32 %v101, %v199
    %v201 = vpop.f32.mrf.mxu0
    %v202 = vadd.f32 %v105, %v201
    %203 = vmatprep.mubr.f32.mxu0 0.0
    %204 = vmatmul.mubr.f32.gmra.mxu0 %v119
    %v205 = vpop.f32.mrf.mxu0
    %v206 = vadd.f32 %v101, %v205
    %v207 = vpop.f32.mrf.mxu0
    %v208 = vadd.f32 %v105, %v207
    %209 = vdwg.mxu0
    %v214 = vrot.slane %v194, 7
    %vm215 = vcmask 1041409
    %v216 = vsel %vm215, %v214, %v188
    %v217 = vrot.slane %v200, 6
    %vm218 = vcmask 1042434
    %v219 = vsel %vm218, %v217, %v216
    %v220 = vrot.slane %v206, 5
    %vm221 = vcmask 1043459
    %v222 = vsel %vm221, %v220, %v219
    %v228 = vrot.slane %v190, 7
    %v229 = vrot.slane %v196, 6
    %v230 = vsel %vm215, %v229, %v228
    %v231 = vrot.slane %v202, 5
    %v232 = vsel %vm218, %v231, %v230
    %v233 = vrot.slane %v208, 4
    %v234 = vsel %vm221, %v233, %v232
    %v236 = vtanh.pop %v222
    %v237 = vtanh.pop %v234
    %v238 = vsel %vm218, %v214, %v188
    %v239 = vsel %vm221, %v217, %v238
    %vm240 = vcmask 1044484
    %v241 = vsel %vm240, %v220, %v239
    %v242 = vrot.slane %v190, 5
    %v243 = vrot.slane %v196, 4
    %v244 = vsel %vm218, %v243, %v242
    %v245 = vrot.slane %v202, 3
    %v246 = vsel %vm221, %v245, %v244
    %v247 = vrot.slane %v208, 2
    %v248 = vsel %vm240, %v247, %v246
    %v249 = vrot.slane %v241, 1
    %v250 = vrot.slane %v248, 1
    %253 = vmatprep.subr.mxu0 %v60
    %254 = vmatpush1.msra.mxu0 %v59
    %255 = vmatprep.subr.mxu0 %v58
    %256 = vmatpush1.msra.mxu0 %v57
    %257 = vmatprep.subr.mxu0 %v56
    %258 = vmatpush1.msra.mxu0 %v55
    %259 = vmatprep.subr.mxu0 %v54
    %260 = vmatpush1.msra.mxu0 %v53
    %261 = vmatprep.subr.mxu0 %v52
    %262 = vmatpush1.msra.mxu0 %v51
    %263 = vmatprep.subr.mxu0 %v50
    %264 = vmatpush1.msra.mxu0 %v49
    %265 = vmatprep.subr.mxu0 %v48
    %266 = vmatpush1.msra.mxu0 %v47
    %267 = vmatprep.subr.mxu0 %v46
    %268 = vmatpush1.msra.mxu0 %v45
    %269 = vmatprep.subr.mxu0 %v44
    %270 = vmatpush1.msra.mxu0 %v43
    %271 = vmatprep.subr.mxu0 %v42
    %272 = vmatpush1.msra.mxu0 %v41
    %273 = vmatprep.subr.mxu0 %v40
    %274 = vmatpush1.msra.mxu0 %v39
    %275 = vmatprep.subr.mxu0 %v38
    %276 = vmatpush1.msra.mxu0 %v37
    %277 = vmatprep.subr.mxu0 %v36
    %278 = vmatpush1.msra.mxu0 %v35
    %279 = vmatprep.subr.mxu0 %v34
    %280 = vmatpush1.msra.mxu0 %v33
    %281 = vmatprep.subr.mxu0 %v32
    %282 = vmatpush1.msra.mxu0 %v31
    %283 = vmatprep.subr.mxu0 %v30
    %284 = vmatpush1.msra.mxu0 %v29
    %285 = vmatprep.subr.mxu0 %v92
    %286 = vmatpush2.msra.mxu0 %v91
    %287 = vmatprep.subr.mxu0 %v90
    %288 = vmatpush2.msra.mxu0 %v89
    %289 = vmatprep.subr.mxu0 %v88
    %290 = vmatpush2.msra.mxu0 %v87
    %291 = vmatprep.subr.mxu0 %v86
    %292 = vmatpush2.msra.mxu0 %v85
    %293 = vmatprep.subr.mxu0 %v84
    %294 = vmatpush2.msra.mxu0 %v83
    %295 = vmatprep.subr.mxu0 %v82
    %296 = vmatpush2.msra.mxu0 %v81
    %297 = vmatprep.subr.mxu0 %v80
    %298 = vmatpush2.msra.mxu0 %v79
    %299 = vmatprep.subr.mxu0 %v78
    %300 = vmatpush2.msra.mxu0 %v77
    %301 = vmatprep.subr.mxu0 %v76
    %302 = vmatpush2.msra.mxu0 %v75
    %303 = vmatprep.subr.mxu0 %v74
    %304 = vmatpush2.msra.mxu0 %v73
    %305 = vmatprep.subr.mxu0 %v72
    %306 = vmatpush2.msra.mxu0 %v71
    %307 = vmatprep.subr.mxu0 %v70
    %308 = vmatpush2.msra.mxu0 %v69
    %309 = vmatprep.subr.mxu0 %v68
    %310 = vmatpush2.msra.mxu0 %v67
    %311 = vmatprep.subr.mxu0 %v66
    %312 = vmatpush2.msra.mxu0 %v65
    %313 = vmatprep.subr.mxu0 %v64
    %314 = vmatpush2.msra.mxu0 %v63
    %315 = vmatprep.subr.mxu0 %v62
    %316 = vmatpush2.msra.mxu0 %v61
    %317 = vmatprep.mubr.f32.mxu0 %v237
    %318 = vmatmul.mubr.f32.gmra.mxu0 %v236
    %v319 = vpop.f32.mrf.mxu0
    %v320 = vadd.f32 %v249, %v319
    %v321 = vpop.f32.mrf.mxu0
    %v322 = vadd.f32 %v250, %v321
    %323 = vdwg.mxu0
    %v324 = vtanh.pop %v320
    %v325 = vtanh.pop %v322
    %v326 = vsel %vm221, %v214, %v188
    %v327 = vsel %vm240, %v217, %v326
    %vm328 = vcmask 1045509
    %v329 = vsel %vm328, %v220, %v327
    %v330 = vrot.slane %v190, 3
    %v331 = vrot.slane %v196, 2
    %v332 = vsel %vm221, %v331, %v330
    %v333 = vrot.slane %v202, 1
    %v334 = vsel %vm240, %v333, %v332
    %v335 = vsel %vm328, %v208, %v334
    %v336 = vrot.slane %v329, 2
    %v337 = vrot.slane %v335, 2
    %340 = vmatprep.subr.mxu0 %v60
    %341 = vmatpush1.msra.mxu0 %v59
    %342 = vmatprep.subr.mxu0 %v58
    %343 = vmatpush1.msra.mxu0 %v57
    %344 = vmatprep.subr.mxu0 %v56
    %345 = vmatpush1.msra.mxu0 %v55
    %346 = vmatprep.subr.mxu0 %v54
    %347 = vmatpush1.msra.mxu0 %v53
    %348 = vmatprep.subr.mxu0 %v52
    %349 = vmatpush1.msra.mxu0 %v51
    %350 = vmatprep.subr.mxu0 %v50
    %351 = vmatpush1.msra.mxu0 %v49
    %352 = vmatprep.subr.mxu0 %v48
    %353 = vmatpush1.msra.mxu0 %v47
    %354 = vmatprep.subr.mxu0 %v46
    %355 = vmatpush1.msra.mxu0 %v45
    %356 = vmatprep.subr.mxu0 %v44
    %357 = vmatpush1.msra.mxu0 %v43
    %358 = vmatprep.subr.mxu0 %v42
    %359 = vmatpush1.msra.mxu0 %v41
    %360 = vmatprep.subr.mxu0 %v40
    %361 = vmatpush1.msra.mxu0 %v39
    %362 = vmatprep.subr.mxu0 %v38
    %363 = vmatpush1.msra.mxu0 %v37
    %364 = vmatprep.subr.mxu0 %v36
    %365 = vmatpush1.msra.mxu0 %v35
    %366 = vmatprep.subr.mxu0 %v34
    %367 = vmatpush1.msra.mxu0 %v33
    %368 = vmatprep.subr.mxu0 %v32
    %369 = vmatpush1.msra.mxu0 %v31
    %370 = vmatprep.subr.mxu0 %v30
    %371 = vmatpush1.msra.mxu0 %v29
    %372 = vmatprep.subr.mxu0 %v92
    %373 = vmatpush2.msra.mxu0 %v91
    %374 = vmatprep.subr.mxu0 %v90
    %375 = vmatpush2.msra.mxu0 %v89
    %376 = vmatprep.subr.mxu0 %v88
    %377 = vmatpush2.msra.mxu0 %v87
    %378 = vmatprep.subr.mxu0 %v86
    %379 = vmatpush2.msra.mxu0 %v85
    %380 = vmatprep.subr.mxu0 %v84
    %381 = vmatpush2.msra.mxu0 %v83
    %382 = vmatprep.subr.mxu0 %v82
    %383 = vmatpush2.msra.mxu0 %v81
    %384 = vmatprep.subr.mxu0 %v80
    %385 = vmatpush2.msra.mxu0 %v79
    %386 = vmatprep.subr.mxu0 %v78
    %387 = vmatpush2.msra.mxu0 %v77
    %388 = vmatprep.subr.mxu0 %v76
    %389 = vmatpush2.msra.mxu0 %v75
    %390 = vmatprep.subr.mxu0 %v74
    %391 = vmatpush2.msra.mxu0 %v73
    %392 = vmatprep.subr.mxu0 %v72
    %393 = vmatpush2.msra.mxu0 %v71
    %394 = vmatprep.subr.mxu0 %v70
    %395 = vmatpush2.msra.mxu0 %v69
    %396 = vmatprep.subr.mxu0 %v68
    %397 = vmatpush2.msra.mxu0 %v67
    %398 = vmatprep.subr.mxu0 %v66
    %399 = vmatpush2.msra.mxu0 %v65
    %400 = vmatprep.subr.mxu0 %v64
    %401 = vmatpush2.msra.mxu0 %v63
    %402 = vmatprep.subr.mxu0 %v62
    %403 = vmatpush2.msra.mxu0 %v61
    %404 = vmatprep.mubr.f32.mxu0 %v325
    %405 = vmatmul.mubr.f32.gmra.mxu0 %v324
    %v406 = vpop.f32.mrf.mxu0
    %v407 = vadd.f32 %v336, %v406
    %v408 = vpop.f32.mrf.mxu0
    %v409 = vadd.f32 %v337, %v408
    %410 = vdwg.mxu0
    %v411 = vtanh.pop %v407
    %v412 = vtanh.pop %v409
    %v413 = vsel %vm240, %v214, %v188
    %v414 = vsel %vm328, %v217, %v413
    %vm415 = vcmask 1046534
    %v416 = vsel %vm415, %v220, %v414
    %v417 = vrot.slane %v190, 1
    %v418 = vsel %vm240, %v196, %v417
    %v419 = vrot.slane %v202, 7
    %v420 = vsel %vm328, %v419, %v418
    %v421 = vrot.slane %v208, 6
    %v422 = vsel %vm415, %v421, %v420
    %v423 = vrot.slane %v416, 3
    %v424 = vrot.slane %v422, 3
    %427 = vmatprep.subr.mxu0 %v60
    %428 = vmatpush1.msra.mxu0 %v59
    %429 = vmatprep.subr.mxu0 %v58
    %430 = vmatpush1.msra.mxu0 %v57
    %431 = vmatprep.subr.mxu0 %v56
    %432 = vmatpush1.msra.mxu0 %v55
    %433 = vmatprep.subr.mxu0 %v54
    %434 = vmatpush1.msra.mxu0 %v53
    %435 = vmatprep.subr.mxu0 %v52
    %436 = vmatpush1.msra.mxu0 %v51
    %437 = vmatprep.subr.mxu0 %v50
    %438 = vmatpush1.msra.mxu0 %v49
    %439 = vmatprep.subr.mxu0 %v48
    %440 = vmatpush1.msra.mxu0 %v47
    %441 = vmatprep.subr.mxu0 %v46
    %442 = vmatpush1.msra.mxu0 %v45
    %443 = vmatprep.subr.mxu0 %v44
    %444 = vmatpush1.msra.mxu0 %v43
    %445 = vmatprep.subr.mxu0 %v42
    %446 = vmatpush1.msra.mxu0 %v41
    %447 = vmatprep.subr.mxu0 %v40
    %448 = vmatpush1.msra.mxu0 %v39
    %449 = vmatprep.subr.mxu0 %v38
    %450 = vmatpush1.msra.mxu0 %v37
    %451 = vmatprep.subr.mxu0 %v36
    %452 = vmatpush1.msra.mxu0 %v35
    %453 = vmatprep.subr.mxu0 %v34
    %454 = vmatpush1.msra.mxu0 %v33
    %455 = vmatprep.subr.mxu0 %v32
    %456 = vmatpush1.msra.mxu0 %v31
    %457 = vmatprep.subr.mxu0 %v30
    %458 = vmatpush1.msra.mxu0 %v29
    %459 = vmatprep.subr.mxu0 %v92
    %460 = vmatpush2.msra.mxu0 %v91
    %461 = vmatprep.subr.mxu0 %v90
    %462 = vmatpush2.msra.mxu0 %v89
    %463 = vmatprep.subr.mxu0 %v88
    %464 = vmatpush2.msra.mxu0 %v87
    %465 = vmatprep.subr.mxu0 %v86
    %466 = vmatpush2.msra.mxu0 %v85
    %467 = vmatprep.subr.mxu0 %v84
    %468 = vmatpush2.msra.mxu0 %v83
    %469 = vmatprep.subr.mxu0 %v82
    %470 = vmatpush2.msra.mxu0 %v81
    %471 = vmatprep.subr.mxu0 %v80
    %472 = vmatpush2.msra.mxu0 %v79
    %473 = vmatprep.subr.mxu0 %v78
    %474 = vmatpush2.msra.mxu0 %v77
    %475 = vmatprep.subr.mxu0 %v76
    %476 = vmatpush2.msra.mxu0 %v75
    %477 = vmatprep.subr.mxu0 %v74
    %478 = vmatpush2.msra.mxu0 %v73
    %479 = vmatprep.subr.mxu0 %v72
    %480 = vmatpush2.msra.mxu0 %v71
    %481 = vmatprep.subr.mxu0 %v70
    %482 = vmatpush2.msra.mxu0 %v69
    %483 = vmatprep.subr.mxu0 %v68
    %484 = vmatpush2.msra.mxu0 %v67
    %485 = vmatprep.subr.mxu0 %v66
    %486 = vmatpush2.msra.mxu0 %v65
    %487 = vmatprep.subr.mxu0 %v64
    %488 = vmatpush2.msra.mxu0 %v63
    %489 = vmatprep.subr.mxu0 %v62
    %490 = vmatpush2.msra.mxu0 %v61
    %491 = vmatprep.mubr.f32.mxu0 %v412
    %492 = vmatmul.mubr.f32.gmra.mxu0 %v411
    %v493 = vpop.f32.mrf.mxu0
    %v494 = vadd.f32 %v423, %v493
    %v495 = vpop.f32.mrf.mxu0
    %v496 = vadd.f32 %v424, %v495
    %497 = vdwg.mxu0
    %v498 = vtanh.pop %v494
    %v499 = vtanh.pop %v496
    %v500 = vsel %vm328, %v214, %v188
    %v501 = vsel %vm415, %v217, %v500
    %vm502 = vcmask 1047559
    %v503 = vsel %vm502, %v220, %v501
    %v504 = vsel %vm328, %v229, %v228
    %v505 = vsel %vm415, %v231, %v504
    %v506 = vsel %vm502, %v233, %v505
    %v507 = vrot.slane %v503, 4
    %v508 = vrot.slane %v506, 4
    %511 = vmatprep.subr.mxu0 %v60
    %512 = vmatpush1.msra.mxu0 %v59
    %513 = vmatprep.subr.mxu0 %v58
    %514 = vmatpush1.msra.mxu0 %v57
    %515 = vmatprep.subr.mxu0 %v56
    %516 = vmatpush1.msra.mxu0 %v55
    %517 = vmatprep.subr.mxu0 %v54
    %518 = vmatpush1.msra.mxu0 %v53
    %519 = vmatprep.subr.mxu0 %v52
    %520 = vmatpush1.msra.mxu0 %v51
    %521 = vmatprep.subr.mxu0 %v50
    %522 = vmatpush1.msra.mxu0 %v49
    %523 = vmatprep.subr.mxu0 %v48
    %524 = vmatpush1.msra.mxu0 %v47
    %525 = vmatprep.subr.mxu0 %v46
    %526 = vmatpush1.msra.mxu0 %v45
    %527 = vmatprep.subr.mxu0 %v44
    %528 = vmatpush1.msra.mxu0 %v43
    %529 = vmatprep.subr.mxu0 %v42
    %530 = vmatpush1.msra.mxu0 %v41
    %531 = vmatprep.subr.mxu0 %v40
    %532 = vmatpush1.msra.mxu0 %v39
    %533 = vmatprep.subr.mxu0 %v38
    %534 = vmatpush1.msra.mxu0 %v37
    %535 = vmatprep.subr.mxu0 %v36
    %536 = vmatpush1.msra.mxu0 %v35
    %537 = vmatprep.subr.mxu0 %v34
    %538 = vmatpush1.msra.mxu0 %v33
    %539 = vmatprep.subr.mxu0 %v32
    %540 = vmatpush1.msra.mxu0 %v31
    %541 = vmatprep.subr.mxu0 %v30
    %542 = vmatpush1.msra.mxu0 %v29
    %543 = vmatprep.subr.mxu0 %v92
    %544 = vmatpush2.msra.mxu0 %v91
    %545 = vmatprep.subr.mxu0 %v90
    %546 = vmatpush2.msra.mxu0 %v89
    %547 = vmatprep.subr.mxu0 %v88
    %548 = vmatpush2.msra.mxu0 %v87
    %549 = vmatprep.subr.mxu0 %v86
    %550 = vmatpush2.msra.mxu0 %v85
    %551 = vmatprep.subr.mxu0 %v84
    %552 = vmatpush2.msra.mxu0 %v83
    %553 = vmatprep.subr.mxu0 %v82
    %554 = vmatpush2.msra.mxu0 %v81
    %555 = vmatprep.subr.mxu0 %v80
    %556 = vmatpush2.msra.mxu0 %v79
    %557 = vmatprep.subr.mxu0 %v78
    %558 = vmatpush2.msra.mxu0 %v77
    %559 = vmatprep.subr.mxu0 %v76
    %560 = vmatpush2.msra.mxu0 %v75
    %561 = vmatprep.subr.mxu0 %v74
    %562 = vmatpush2.msra.mxu0 %v73
    %563 = vmatprep.subr.mxu0 %v72
    %564 = vmatpush2.msra.mxu0 %v71
    %565 = vmatprep.subr.mxu0 %v70
    %566 = vmatpush2.msra.mxu0 %v69
    %567 = vmatprep.subr.mxu0 %v68
    %568 = vmatpush2.msra.mxu0 %v67
    %569 = vmatprep.subr.mxu0 %v66
    %570 = vmatpush2.msra.mxu0 %v65
    %571 = vmatprep.subr.mxu0 %v64
    %572 = vmatpush2.msra.mxu0 %v63
    %573 = vmatprep.subr.mxu0 %v62
    %574 = vmatpush2.msra.mxu0 %v61
    %575 = vmatprep.mubr.f32.mxu0 %v499
    %576 = vmatmul.mubr.f32.gmra.mxu0 %v498
    %v577 = vpop.f32.mrf.mxu0
    %v578 = vadd.f32 %v507, %v577
    %v579 = vpop.f32.mrf.mxu0
    %v580 = vadd.f32 %v508, %v579
    %581 = vdwg.mxu0
    %v582 = vtanh.pop %v578
    %v583 = vtanh.pop %v580
    %v584 = vsel %vm415, %v214, %v188
    %v585 = vsel %vm502, %v217, %v584
    %v586 = vsel %vm415, %v243, %v242
    %v587 = vsel %vm502, %v245, %v586
    %vm588 = vcmask 1042432
    %v589 = vrot.slane %v585, 5
    %v590 = vrot.slane %v220, 5
    %v591 = vsel %vm588, %v589, %v590
    %v592 = vrot.slane %v587, 5
    %v593 = vrot.slane %v247, 5
    %v594 = vsel %vm588, %v592, %v593
    %597 = vmatprep.subr.mxu0 %v60
    %598 = vmatpush1.msra.mxu0 %v59
    %599 = vmatprep.subr.mxu0 %v58
    %600 = vmatpush1.msra.mxu0 %v57
    %601 = vmatprep.subr.mxu0 %v56
    %602 = vmatpush1.msra.mxu0 %v55
    %603 = vmatprep.subr.mxu0 %v54
    %604 = vmatpush1.msra.mxu0 %v53
    %605 = vmatprep.subr.mxu0 %v52
    %606 = vmatpush1.msra.mxu0 %v51
    %607 = vmatprep.subr.mxu0 %v50
    %608 = vmatpush1.msra.mxu0 %v49
    %609 = vmatprep.subr.mxu0 %v48
    %610 = vmatpush1.msra.mxu0 %v47
    %611 = vmatprep.subr.mxu0 %v46
    %612 = vmatpush1.msra.mxu0 %v45
    %613 = vmatprep.subr.mxu0 %v44
    %614 = vmatpush1.msra.mxu0 %v43
    %615 = vmatprep.subr.mxu0 %v42
    %616 = vmatpush1.msra.mxu0 %v41
    %617 = vmatprep.subr.mxu0 %v40
    %618 = vmatpush1.msra.mxu0 %v39
    %619 = vmatprep.subr.mxu0 %v38
    %620 = vmatpush1.msra.mxu0 %v37
    %621 = vmatprep.subr.mxu0 %v36
    %622 = vmatpush1.msra.mxu0 %v35
    %623 = vmatprep.subr.mxu0 %v34
    %624 = vmatpush1.msra.mxu0 %v33
    %625 = vmatprep.subr.mxu0 %v32
    %626 = vmatpush1.msra.mxu0 %v31
    %627 = vmatprep.subr.mxu0 %v30
    %628 = vmatpush1.msra.mxu0 %v29
    %629 = vmatprep.subr.mxu0 %v92
    %630 = vmatpush2.msra.mxu0 %v91
    %631 = vmatprep.subr.mxu0 %v90
    %632 = vmatpush2.msra.mxu0 %v89
    %633 = vmatprep.subr.mxu0 %v88
    %634 = vmatpush2.msra.mxu0 %v87
    %635 = vmatprep.subr.mxu0 %v86
    %636 = vmatpush2.msra.mxu0 %v85
    %637 = vmatprep.subr.mxu0 %v84
    %638 = vmatpush2.msra.mxu0 %v83
    %639 = vmatprep.subr.mxu0 %v82
    %640 = vmatpush2.msra.mxu0 %v81
    %641 = vmatprep.subr.mxu0 %v80
    %642 = vmatpush2.msra.mxu0 %v79
    %643 = vmatprep.subr.mxu0 %v78
    %644 = vmatpush2.msra.mxu0 %v77
    %645 = vmatprep.subr.mxu0 %v76
    %646 = vmatpush2.msra.mxu0 %v75
    %647 = vmatprep.subr.mxu0 %v74
    %648 = vmatpush2.msra.mxu0 %v73
    %649 = vmatprep.subr.mxu0 %v72
    %650 = vmatpush2.msra.mxu0 %v71
    %651 = vmatprep.subr.mxu0 %v70
    %652 = vmatpush2.msra.mxu0 %v69
    %653 = vmatprep.subr.mxu0 %v68
    %654 = vmatpush2.msra.mxu0 %v67
    %655 = vmatprep.subr.mxu0 %v66
    %656 = vmatpush2.msra.mxu0 %v65
    %657 = vmatprep.subr.mxu0 %v64
    %658 = vmatpush2.msra.mxu0 %v63
    %659 = vmatprep.subr.mxu0 %v62
    %660 = vmatpush2.msra.mxu0 %v61
    %661 = vmatprep.mubr.f32.mxu0 %v583
    %662 = vmatmul.mubr.f32.gmra.mxu0 %v582
    %v663 = vpop.f32.mrf.mxu0
    %v664 = vadd.f32 %v591, %v663
    %v665 = vpop.f32.mrf.mxu0
    %v666 = vadd.f32 %v594, %v665
    %667 = vdwg.mxu0
    %v668 = vtanh.pop %v664
    %v669 = vtanh.pop %v666
    %v670 = vsel %vm502, %v214, %v188
    %v671 = vsel %vm215, %v220, %v217
    %v672 = vsel %vm502, %v331, %v330
    %v673 = vsel %vm215, %v208, %v333
    %vm674 = vcmask 1041408
    %v675 = vrot.slane %v670, 6
    %v676 = vrot.slane %v671, 6
    %v677 = vsel %vm674, %v675, %v676
    %v678 = vrot.slane %v672, 6
    %v679 = vrot.slane %v673, 6
    %v680 = vsel %vm674, %v678, %v679
    %683 = vmatprep.subr.mxu0 %v60
    %684 = vmatpush1.msra.mxu0 %v59
    %685 = vmatprep.subr.mxu0 %v58
    %686 = vmatpush1.msra.mxu0 %v57
    %687 = vmatprep.subr.mxu0 %v56
    %688 = vmatpush1.msra.mxu0 %v55
    %689 = vmatprep.subr.mxu0 %v54
    %690 = vmatpush1.msra.mxu0 %v53
    %691 = vmatprep.subr.mxu0 %v52
    %692 = vmatpush1.msra.mxu0 %v51
    %693 = vmatprep.subr.mxu0 %v50
    %694 = vmatpush1.msra.mxu0 %v49
    %695 = vmatprep.subr.mxu0 %v48
    %696 = vmatpush1.msra.mxu0 %v47
    %697 = vmatprep.subr.mxu0 %v46
    %698 = vmatpush1.msra.mxu0 %v45
    %699 = vmatprep.subr.mxu0 %v44
    %700 = vmatpush1.msra.mxu0 %v43
    %701 = vmatprep.subr.mxu0 %v42
    %702 = vmatpush1.msra.mxu0 %v41
    %703 = vmatprep.subr.mxu0 %v40
    %704 = vmatpush1.msra.mxu0 %v39
    %705 = vmatprep.subr.mxu0 %v38
    %706 = vmatpush1.msra.mxu0 %v37
    %707 = vmatprep.subr.mxu0 %v36
    %708 = vmatpush1.msra.mxu0 %v35
    %709 = vmatprep.subr.mxu0 %v34
    %710 = vmatpush1.msra.mxu0 %v33
    %711 = vmatprep.subr.mxu0 %v32
    %712 = vmatpush1.msra.mxu0 %v31
    %713 = vmatprep.subr.mxu0 %v30
    %714 = vmatpush1.msra.mxu0 %v29
    %715 = vmatprep.subr.mxu0 %v92
    %716 = vmatpush2.msra.mxu0 %v91
    %717 = vmatprep.subr.mxu0 %v90
    %718 = vmatpush2.msra.mxu0 %v89
    %719 = vmatprep.subr.mxu0 %v88
    %720 = vmatpush2.msra.mxu0 %v87
    %721 = vmatprep.subr.mxu0 %v86
    %722 = vmatpush2.msra.mxu0 %v85
    %723 = vmatprep.subr.mxu0 %v84
    %724 = vmatpush2.msra.mxu0 %v83
    %725 = vmatprep.subr.mxu0 %v82
    %726 = vmatpush2.msra.mxu0 %v81
    %727 = vmatprep.subr.mxu0 %v80
    %728 = vmatpush2.msra.mxu0 %v79
    %729 = vmatprep.subr.mxu0 %v78
    %730 = vmatpush2.msra.mxu0 %v77
    %731 = vmatprep.subr.mxu0 %v76
    %732 = vmatpush2.msra.mxu0 %v75
    %733 = vmatprep.subr.mxu0 %v74
    %734 = vmatpush2.msra.mxu0 %v73
    %735 = vmatprep.subr.mxu0 %v72
    %736 = vmatpush2.msra.mxu0 %v71
    %737 = vmatprep.subr.mxu0 %v70
    %738 = vmatpush2.msra.mxu0 %v69
    %739 = vmatprep.subr.mxu0 %v68
    %740 = vmatpush2.msra.mxu0 %v67
    %741 = vmatprep.subr.mxu0 %v66
    %742 = vmatpush2.msra.mxu0 %v65
    %743 = vmatprep.subr.mxu0 %v64
    %744 = vmatpush2.msra.mxu0 %v63
    %745 = vmatprep.subr.mxu0 %v62
    %746 = vmatpush2.msra.mxu0 %v61
    %747 = vmatprep.mubr.f32.mxu0 %v669
    %748 = vmatmul.mubr.f32.gmra.mxu0 %v668
    %v749 = vpop.f32.mrf.mxu0
    %v750 = vadd.f32 %v677, %v749
    %v751 = vpop.f32.mrf.mxu0
    %v752 = vadd.f32 %v680, %v751
    %753 = vdwg.mxu0
    %v754 = vtanh.pop %v750
    %v755 = vtanh.pop %v752
    %v756 = vsel %vm215, %v217, %v214
    %v757 = vsel %vm218, %v220, %v756
    %v758 = vsel %vm215, %v419, %v196
    %v759 = vsel %vm218, %v421, %v758
    %vm760 = vcmask 1040384
    %v761 = vrot.slane %v188, 7
    %v762 = vrot.slane %v757, 7
    %v763 = vsel %vm760, %v761, %v762
    %v764 = vrot.slane %v417, 7
    %v765 = vrot.slane %v759, 7
    %v766 = vsel %vm760, %v764, %v765
    %769 = vmatprep.subr.mxu0 %v60
    %770 = vmatpush1.msra.mxu0 %v59
    %771 = vmatprep.subr.mxu0 %v58
    %772 = vmatpush1.msra.mxu0 %v57
    %773 = vmatprep.subr.mxu0 %v56
    %774 = vmatpush1.msra.mxu0 %v55
    %775 = vmatprep.subr.mxu0 %v54
    %776 = vmatpush1.msra.mxu0 %v53
    %777 = vmatprep.subr.mxu0 %v52
    %778 = vmatpush1.msra.mxu0 %v51
    %779 = vmatprep.subr.mxu0 %v50
    %780 = vmatpush1.msra.mxu0 %v49
    %781 = vmatprep.subr.mxu0 %v48
    %782 = vmatpush1.msra.mxu0 %v47
    %783 = vmatprep.subr.mxu0 %v46
    %784 = vmatpush1.msra.mxu0 %v45
    %785 = vmatprep.subr.mxu0 %v44
    %786 = vmatpush1.msra.mxu0 %v43
    %787 = vmatprep.subr.mxu0 %v42
    %788 = vmatpush1.msra.mxu0 %v41
    %789 = vmatprep.subr.mxu0 %v40
    %790 = vmatpush1.msra.mxu0 %v39
    %791 = vmatprep.subr.mxu0 %v38
    %792 = vmatpush1.msra.mxu0 %v37
    %793 = vmatprep.subr.mxu0 %v36
    %794 = vmatpush1.msra.mxu0 %v35
    %795 = vmatprep.subr.mxu0 %v34
    %796 = vmatpush1.msra.mxu0 %v33
    %797 = vmatprep.subr.mxu0 %v32
    %798 = vmatpush1.msra.mxu0 %v31
    %799 = vmatprep.subr.mxu0 %v30
    %800 = vmatpush1.msra.mxu0 %v29
    %801 = vmatprep.subr.mxu0 %v92
    %802 = vmatpush2.msra.mxu0 %v91
    %803 = vmatprep.subr.mxu0 %v90
    %804 = vmatpush2.msra.mxu0 %v89
    %805 = vmatprep.subr.mxu0 %v88
    %806 = vmatpush2.msra.mxu0 %v87
    %807 = vmatprep.subr.mxu0 %v86
    %808 = vmatpush2.msra.mxu0 %v85
    %809 = vmatprep.subr.mxu0 %v84
    %810 = vmatpush2.msra.mxu0 %v83
    %811 = vmatprep.subr.mxu0 %v82
    %812 = vmatpush2.msra.mxu0 %v81
    %813 = vmatprep.subr.mxu0 %v80
    %814 = vmatpush2.msra.mxu0 %v79
    %815 = vmatprep.subr.mxu0 %v78
    %816 = vmatpush2.msra.mxu0 %v77
    %817 = vmatprep.subr.mxu0 %v76
    %818 = vmatpush2.msra.mxu0 %v75
    %819 = vmatprep.subr.mxu0 %v74
    %820 = vmatpush2.msra.mxu0 %v73
    %821 = vmatprep.subr.mxu0 %v72
    %822 = vmatpush2.msra.mxu0 %v71
    %823 = vmatprep.subr.mxu0 %v70
    %824 = vmatpush2.msra.mxu0 %v69
    %825 = vmatprep.subr.mxu0 %v68
    %826 = vmatpush2.msra.mxu0 %v67
    %827 = vmatprep.subr.mxu0 %v66
    %828 = vmatpush2.msra.mxu0 %v65
    %829 = vmatprep.subr.mxu0 %v64
    %830 = vmatpush2.msra.mxu0 %v63
    %831 = vmatprep.subr.mxu0 %v62
    %832 = vmatpush2.msra.mxu0 %v61
    %833 = vmatprep.mubr.f32.mxu0 %v755
    %834 = vmatmul.mubr.f32.gmra.mxu0 %v754
    %v835 = vpop.f32.mrf.mxu0
    %v836 = vadd.f32 %v763, %v835
    %v837 = vpop.f32.mrf.mxu0
    %v838 = vadd.f32 %v766, %v837
    %839 = vdwg.mxu0
    %v840 = vtanh.pop %v836
    %v841 = vtanh.pop %v838
    %v842 = vld [vmem:[%s4] sm:$0xff]
    %v843 = vld [vmem:[%s4 + $0x8] sm:$0xff]
    %v844 = vld [vmem:[%s4 + $0x10] sm:$0xff]
    %v845 = vld [vmem:[%s4 + $0x18] sm:$0xff]
    %v846 = vld [vmem:[%s4 + $0x20] sm:$0xff]
    %v847 = vld [vmem:[%s4 + $0x28] sm:$0xff]
    %v848 = vld [vmem:[%s4 + $0x30] sm:$0xff]
    %v849 = vld [vmem:[%s4 + $0x38] sm:$0xff]
    %v850 = vld [vmem:[%s4 + $0x40] sm:$0xff]
    %v851 = vld [vmem:[%s4 + $0x48] sm:$0xff]
    %v852 = vld [vmem:[%s4 + $0x50] sm:$0xff]
    %v853 = vld [vmem:[%s4 + $0x58] sm:$0xff]
    %v854 = vld [vmem:[%s4 + $0x60] sm:$0xff]
    %v855 = vld [vmem:[%s4 + $0x68] sm:$0xff]
    %v856 = vld [vmem:[%s4 + $0x70] sm:$0xff]
    %v857 = vld [vmem:[%s4 + $0x78] sm:$0xff]
    %v858 = vld [vmem:[%s4 + $0x80] sm:$0xff]
    %v859 = vld [vmem:[%s4 + $0x88] sm:$0xff]
    %v860 = vld [vmem:[%s4 + $0x90] sm:$0xff]
    %v861 = vld [vmem:[%s4 + $0x98] sm:$0xff]
    %v862 = vld [vmem:[%s4 + $0xa0] sm:$0xff]
    %v863 = vld [vmem:[%s4 + $0xa8] sm:$0xff]
    %v864 = vld [vmem:[%s4 + $0xb0] sm:$0xff]
    %v865 = vld [vmem:[%s4 + $0xb8] sm:$0xff]
    %v866 = vld [vmem:[%s4 + $0xc0] sm:$0xff]
    %v867 = vld [vmem:[%s4 + $0xc8] sm:$0xff]
    %v868 = vld [vmem:[%s4 + $0xd0] sm:$0xff]
    %v869 = vld [vmem:[%s4 + $0xd8] sm:$0xff]
    %v870 = vld [vmem:[%s4 + $0xe0] sm:$0xff]
    %v871 = vld [vmem:[%s4 + $0xe8] sm:$0xff]
    %v872 = vld [vmem:[%s4 + $0xf0] sm:$0xff]
    %v873 = vld [vmem:[%s4 + $0xf8] sm:$0xff]
    %v874 = vld [vmem:[%s5] sm:$0x1]
    %v876 = vlaneseq
    %v877 = vshrl.u32 %v876, 7
    %v878 = vsub.s32 0, %v877
    %v879 = vrot.slane %v874, %v878
    %881 = vmatprep.subr.mxu0 0.0
    %882 = vmatpush1.msra.mxu0 %v857
    %883 = vmatprep.subr.mxu0 0.0
    %884 = vmatpush1.msra.mxu0 %v856
    %885 = vmatprep.subr.mxu0 0.0
    %886 = vmatpush1.msra.mxu0 %v855
    %887 = vmatprep.subr.mxu0 0.0
    %888 = vmatpush1.msra.mxu0 %v854
    %889 = vmatprep.subr.mxu0 0.0
    %890 = vmatpush1.msra.mxu0 %v853
    %891 = vmatprep.subr.mxu0 0.0
    %892 = vmatpush1.msra.mxu0 %v852
    %893 = vmatprep.subr.mxu0 0.0
    %894 = vmatpush1.msra.mxu0 %v851
    %895 = vmatprep.subr.mxu0 0.0
    %896 = vmatpush1.msra.mxu0 %v850
    %897 = vmatprep.subr.mxu0 0.0
    %898 = vmatpush1.msra.mxu0 %v849
    %899 = vmatprep.subr.mxu0 0.0
    %900 = vmatpush1.msra.mxu0 %v848
    %901 = vmatprep.subr.mxu0 0.0
    %902 = vmatpush1.msra.mxu0 %v847
    %903 = vmatprep.subr.mxu0 0.0
    %904 = vmatpush1.msra.mxu0 %v846
    %905 = vmatprep.subr.mxu0 0.0
    %906 = vmatpush1.msra.mxu0 %v845
    %907 = vmatprep.subr.mxu0 0.0
    %908 = vmatpush1.msra.mxu0 %v844
    %909 = vmatprep.subr.mxu0 0.0
    %910 = vmatpush1.msra.mxu0 %v843
    %911 = vmatprep.subr.mxu0 0.0
    %912 = vmatpush1.msra.mxu0 %v842
    %913 = vmatprep.subr.mxu0 0.0
    %914 = vmatpush2.msra.mxu0 %v873
    %915 = vmatprep.subr.mxu0 0.0
    %916 = vmatpush2.msra.mxu0 %v872
    %917 = vmatprep.subr.mxu0 0.0
    %918 = vmatpush2.msra.mxu0 %v871
    %919 = vmatprep.subr.mxu0 0.0
    %920 = vmatpush2.msra.mxu0 %v870
    %921 = vmatprep.subr.mxu0 0.0
    %922 = vmatpush2.msra.mxu0 %v869
    %923 = vmatprep.subr.mxu0 0.0
    %924 = vmatpush2.msra.mxu0 %v868
    %925 = vmatprep.subr.mxu0 0.0
    %926 = vmatpush2.msra.mxu0 %v867
    %927 = vmatprep.subr.mxu0 0.0
    %928 = vmatpush2.msra.mxu0 %v866
    %929 = vmatprep.subr.mxu0 0.0
    %930 = vmatpush2.msra.mxu0 %v865
    %931 = vmatprep.subr.mxu0 0.0
    %932 = vmatpush2.msra.mxu0 %v864
    %933 = vmatprep.subr.mxu0 0.0
    %934 = vmatpush2.msra.mxu0 %v863
    %935 = vmatprep.subr.mxu0 0.0
    %936 = vmatpush2.msra.mxu0 %v862
    %937 = vmatprep.subr.mxu0 0.0
    %938 = vmatpush2.msra.mxu0 %v861
    %939 = vmatprep.subr.mxu0 0.0
    %940 = vmatpush2.msra.mxu0 %v860
    %941 = vmatprep.subr.mxu0 0.0
    %942 = vmatpush2.msra.mxu0 %v859
    %943 = vmatprep.subr.mxu0 0.0
    %944 = vmatpush2.msra.mxu0 %v858
    %945 = vmatprep.mubr.f32.mxu0 %v841
    %946 = vmatmul.mubr.f32.gmra.mxu0 %v840
    %v947 = vpop.f32.mrf.mxu0
    %v948 = vadd.f32 %v879, %v947
    %v949 = vpop.f32.mrf.mxu0
    %950 = vdwg.mxu0
    %vm951 = vcmask 35840
    %952 = vst.msk [vmem:[#allocation2] sm:$0xf] %vm951, %v948
    // Predicated region
    $region26: #{bi_rnn_model_forward.1} parent=1 // pred_check
      _
    $region27: #{bi_rnn_model_forward.1} parent=1 // pred_check_branch
      %954 = sbr.rel (0) target = $region29
    $region28: #{bi_rnn_model_forward.1} parent=1 // pred_region
      %s956 = ssub.s32 64, 64
      %957 = vsyncadd [#allocation3], %s956
      %s959 = sshll.u32 [#allocation2], 4
      %s960 = int_to_ptr.vmem [resolvable:$true] %s959
      %962 = dma.vmem_to_hbm [thread:$0]  %s960, 64, %s6, [#allocation3]
    $region29: #{bi_rnn_model_forward.1} parent=1 // pred_fallthru
      _
    // Predicated region
    $region30: #{bi_rnn_model_forward.1} parent=1 // pred_check
      _
    $region31: #{bi_rnn_model_forward.1} parent=1 // pred_check_branch
      %964 = sbr.rel (0) target = $region33
    $region32: #{bi_rnn_model_forward.1} parent=1 // pred_region
      %965 = dma.done [#allocation3], 64
    $region33: #{bi_rnn_model_forward.1} parent=1 // pred_fallthru
      _
    %966 = vsyncpa [#allocation3], 1

</llo_original>
